<compile_context>
chip_gen: v7x
topology: tpu7x:2x2x1
jax: 0.10.0
libtpu: 0.0.40
codegen_flags: <defaults>
</compile_context>

<pallas_src>
import functools
import math

import jax
import jax.numpy as jnp
from jax.experimental import pallas as pl
from jax.experimental.pallas import tpu as pltpu

_HALF_PI = math.pi / 2.0


def _round_up(x: int, m: int) -> int:
    return (x + m - 1) // m * m


def _pick_tile_n(d_pad: int, target: int) -> int:
    for t in (target, 512, 256, 128):
        if t <= d_pad and d_pad % t == 0:
            return t
    return d_pad  # d_pad is always a multiple of 128, so we never get here


def _timestep_mlp_kernel(t_ref, w1_ref, b1_ref, w2_ref, b2_ref, o_ref, h_ref,
                         *, half, freq_scale):
    """Grid axis j runs over W2 / output column tiles.

    t_ref  : (B, 128)  f32  VMEM, resident (timesteps in lane 0)
    w1_ref : (C, D)    bf16 VMEM, resident
    b1_ref : (1, D)    f32  VMEM, resident
    w2_ref : (D, TN)   bf16 VMEM, column block j (double-buffered by Pallas)
    b2_ref : (1, TN)   f32  VMEM, column block j
    o_ref  : (B, TN)   f32  VMEM, column block j
    h_ref  : (B, D)    f32  VMEM scratch: SiLU(emb @ W1 + b1), written at j == 0
    """
    j = pl.program_id(0)

    @pl.when(j == 0)
    def _compute_hidden():
        B, _ = h_ref.shape
        C = w1_ref.shape[0]

        col = jax.lax.broadcasted_iota(jnp.int32, (B, C), 1)
        # k = col mod half (second half reuses the same frequency ladder).
        k = jnp.where(col < half, col, col - half).astype(jnp.float32)
        freq = jnp.exp(k * freq_scale)

        t_col = t_ref[:, 0:1]                       # (B, 1) f32
        arg = t_col * freq

        # concat([sin, cos]) with a single EUP pass: cos(x) = sin(x + pi/2).
        phase = jnp.where(col < half, 0.0, _HALF_PI)
        emb = jnp.sin(arg + phase)
        # zero the pad columns (odd in_channels column + lane padding).
        emb = jnp.where(col < 2 * half, emb, 0.0)

        # linear_1 + bias + SiLU.  bf16 x bf16 -> f32 is the native MXU path;
        # bias-add / SiLU stay in f32.
        h = jnp.dot(emb.astype(jnp.bfloat16), w1_ref[...],
                    preferred_element_type=jnp.float32)
        h = h + b1_ref[...]
        h_ref[...] = h * jax.nn.sigmoid(h)

    # linear_2 for this column block (bf16 inputs, f32 accumulation).
    out = jnp.dot(h_ref[...].astype(jnp.bfloat16), w2_ref[...],
                  preferred_element_type=jnp.float32)
    o_ref[...] = out + b2_ref[...]


def prepare_timestep_embedding_params(w1, b1, w2, b2, weights_dtype=jnp.bfloat16):
    """Pad / cast the Linear parameters ONCE at model-load time (not per step).

    w1: (in_channels, time_embed_dim)      == PyTorch linear_1.weight.T
    b1: (time_embed_dim,)
    w2: (time_embed_dim, time_embed_dim)   == PyTorch linear_2.weight.T
    b2: (time_embed_dim,)
    """
    in_channels, time_embed_dim = w1.shape
    assert w2.shape == (time_embed_dim, time_embed_dim), w2.shape
    assert b1.shape == (time_embed_dim,), b1.shape
    assert b2.shape == (time_embed_dim,), b2.shape

    c_pad = _round_up(in_channels, 128)
    d_pad = _round_up(time_embed_dim, 128)

    w1_p = (jnp.zeros((c_pad, d_pad), weights_dtype)
            .at[:in_channels, :time_embed_dim].set(w1.astype(weights_dtype)))
    w2_p = (jnp.zeros((d_pad, d_pad), weights_dtype)
            .at[:time_embed_dim, :time_embed_dim].set(w2.astype(weights_dtype)))
    b1_p = (jnp.zeros((1, d_pad), jnp.float32)
            .at[0, :time_embed_dim].set(b1.astype(jnp.float32)))
    b2_p = (jnp.zeros((1, d_pad), jnp.float32)
            .at[0, :time_embed_dim].set(b2.astype(jnp.float32)))

    return dict(w1=w1_p, b1=b1_p, w2=w2_p, b2=b2_p,
                in_channels=in_channels, time_embed_dim=time_embed_dim)


def timestep_embedding_forward(timesteps, params, *,
                               downscale_freq_shift: float = 1.0,
                               max_period: int = 10000,
                               tile_n: int = 512):
    """timesteps: (B,) float/int.  params: output of prepare_timestep_embedding_params.
    Returns (B, time_embed_dim) float32."""
    in_channels = params["in_channels"]
    time_embed_dim = params["time_embed_dim"]
    w1_p, b1_p, w2_p, b2_p = params["w1"], params["b1"], params["w2"], params["b2"]
    c_pad, d_pad = w1_p.shape

    half = in_channels // 2
    assert half > 0, "in_channels must be >= 2"
    assert float(half) != float(downscale_freq_shift), \
        "half_dim == downscale_freq_shift divides by zero (same as PyTorch reference)"

    B = timesteps.shape[0]
    b_pad = _round_up(max(B, 1), 8)
    tn = _pick_tile_n(d_pad, tile_n)
    n_blocks = d_pad // tn

    # Tiny lane-dense operand: timesteps live in lane 0 of each row.
    t2d = (jnp.zeros((b_pad, 128), jnp.float32)
           .at[:B, 0].set(timesteps.astype(jnp.float32)))

    kernel = functools.partial(
        _timestep_mlp_kernel,
        half=half,
        freq_scale=-math.log(max_period) / (half - downscale_freq_shift),
    )

    # Resident blocks (x2 for potential double-buffering) + blocked W2/b2/out + scratch.
    vmem_est = (2 * (b_pad * 128 * 4 + c_pad * d_pad * 2 + 2 * d_pad * 4)
                + 2 * (d_pad * tn * 2 + tn * 4 + b_pad * tn * 4)
                + b_pad * d_pad * 4)
    vmem_limit = int(min(128 * 1024 * 1024, max(8 * 1024 * 1024, 3 * vmem_est)))

    cost = pl.CostEstimate(
        flops=2 * b_pad * d_pad * (c_pad + d_pad),
        transcendentals=b_pad * c_pad + b_pad * d_pad,       # sin + sigmoid
        bytes_accessed=(c_pad * d_pad + d_pad * d_pad) * 2   # bf16 weights
                       + b_pad * d_pad * 4                   # output
                       + 2 * d_pad * 4 + b_pad * 128 * 4,    # biases + timesteps
    )

    out = pl.pallas_call(
        kernel,
        out_shape=jax.ShapeDtypeStruct((b_pad, d_pad), jnp.float32),
        grid=(n_blocks,),
        in_specs=[
            pl.BlockSpec((b_pad, 128), lambda j: (0, 0)),    # timesteps (resident)
            pl.BlockSpec((c_pad, d_pad), lambda j: (0, 0)),  # W1 (resident)
            pl.BlockSpec((1, d_pad), lambda j: (0, 0)),      # b1 (resident)
            pl.BlockSpec((d_pad, tn), lambda j: (0, j)),     # W2 column block
            pl.BlockSpec((1, tn), lambda j: (0, j)),         # b2 column block
        ],
        out_specs=pl.BlockSpec((b_pad, tn), lambda j: (0, j)),
        scratch_shapes=[pltpu.VMEM((b_pad, d_pad), jnp.float32)],
        compiler_params=pltpu.CompilerParams(
            dimension_semantics=("arbitrary",),
            vmem_limit_bytes=vmem_limit,
        ),
        cost_estimate=cost,
    )(t2d, w1_p, b1_p, w2_p, b2_p)

    return out[:B, :time_embed_dim]


def _reference_forward(timesteps, w1, b1, w2, b2,
                       downscale_freq_shift: float = 1.0, max_period: int = 10000):
    """Pure-JAX reference mirroring the PyTorch module; matmul inputs are rounded to
    bf16 with f32 accumulation (the kernel's intentional precision choice)."""
    in_channels = w1.shape[0]
    half = in_channels // 2
    exponent = -math.log(max_period) * jnp.arange(half, dtype=jnp.float32)
    exponent = exponent / (half - downscale_freq_shift)
    emb = timesteps.astype(jnp.float32)[:, None] * jnp.exp(exponent)[None, :]
    emb = jnp.concatenate([jnp.sin(emb), jnp.cos(emb)], axis=-1)
    if in_channels % 2 == 1:
        emb = jnp.pad(emb, ((0, 0), (0, 1)))
    hi = jax.lax.Precision.HIGHEST
    f32 = jnp.float32
    h = jnp.dot(emb.astype(jnp.bfloat16).astype(f32),
                w1.astype(jnp.bfloat16).astype(f32), precision=hi) + b1
    h = h * jax.nn.sigmoid(h)
    return jnp.dot(h.astype(jnp.bfloat16).astype(f32),
                   w2.astype(jnp.bfloat16).astype(f32), precision=hi) + b2


if __name__ == "__main__":
    # Small deterministic setup; tile_n=128 exercises a 2-block W2 column grid.
    B = 4
    in_channels = 32        # == linear_1.in_features == sinusoidal embedding dim
    time_embed_dim = 256

    key = jax.random.PRNGKey(0)
    k_t, k_w1, k_b1, k_w2, k_b2 = jax.random.split(key, 5)

    timesteps = jax.random.randint(k_t, (B,), 0, 1000).astype(jnp.float32)

    # Parameters stored as [in, out] (i.e. PyTorch weight.T).
    w1 = 0.05 * jax.random.normal(k_w1, (in_channels, time_embed_dim), jnp.float32)
    b1 = 0.02 * jax.random.normal(k_b1, (time_embed_dim,), jnp.float32)
    w2 = 0.05 * jax.random.normal(k_w2, (time_embed_dim, time_embed_dim), jnp.float32)
    b2 = 0.02 * jax.random.normal(k_b2, (time_embed_dim,), jnp.float32)

    params = prepare_timestep_embedding_params(w1, b1, w2, b2)   # one-time pad/cast
    out = timestep_embedding_forward(timesteps, params, tile_n=128)
    out = jax.block_until_ready(out)

    ref = _reference_forward(timesteps, w1, b1, w2, b2)

    assert out.shape == (B, time_embed_dim), out.shape
    max_err = float(jnp.max(jnp.abs(out - ref)))
    assert jnp.allclose(out, ref, atol=1e-2, rtol=1e-2), f"mismatch vs reference (max abs err {max_err})"

    print("KERNEL_OK")
</pallas_src>

<mosaic_0001>
module attributes {stable_mosaic.version = 11 : i64} {
  func.func @_timestep_mlp_kernel(%arg0: i32, %arg1: memref<8x128xf32, #tpu.memory_space<vmem>>, %arg2: memref<128x256xbf16, #tpu.memory_space<vmem>>, %arg3: memref<1x256xf32, #tpu.memory_space<vmem>>, %arg4: memref<256x128xbf16, #tpu.memory_space<vmem>>, %arg5: memref<1x128xf32, #tpu.memory_space<vmem>>, %arg6: memref<8x128xf32, #tpu.memory_space<vmem>>, %arg7: memref<8x256xf32, #tpu.memory_space<vmem>>) attributes {dimension_semantics = [#tpu.dimension_semantics<arbitrary>], iteration_bounds = array<i64: 2>, scalar_prefetch = 0 : i64, scratch_operands = 1 : i64, tpu.core_type = #tpu.core_type<tc>, window_params = [{pipeline_mode = #tpu.pipeline_mode<synchronous>, transform_indices = @transform_0, window_bounds = array<i64: 8, 128>}, {pipeline_mode = #tpu.pipeline_mode<synchronous>, transform_indices = @transform_1, window_bounds = array<i64: 128, 256>}, {pipeline_mode = #tpu.pipeline_mode<synchronous>, transform_indices = @transform_2, window_bounds = array<i64: 1, 256>}, {transform_indices = @transform_3, window_bounds = array<i64: 256, 128>}, {transform_indices = @transform_4, window_bounds = array<i64: 1, 128>}, {transform_indices = @transform_5, window_bounds = array<i64: 8, 128>}]} {
    %c0_i32 = arith.constant 0 : i32
    %0 = arith.cmpi eq, %arg0, %c0_i32 : i32
    %1 = arith.extui %0 : i1 to i32
    %c0_i32_0 = arith.constant 0 : i32
    %2 = arith.cmpi ne, %1, %c0_i32_0 : i32
    scf.if %2 {
      %11 = tpu.iota {dimensions = array<i32: 1>} : vector<8x128xi32>
      %c16_i32 = arith.constant 16 : i32
      %12 = vector.broadcast %c16_i32 : i32 to vector<8x128xi32>
      %13 = arith.cmpi slt, %11, %12 : vector<8x128xi32>
      %c16_i32_8 = arith.constant 16 : i32
      %14 = vector.broadcast %c16_i32_8 : i32 to vector<8x128xi32>
      %15 = arith.subi %11, %14 : vector<8x128xi32>
      %16 = arith.select %13, %11, %15 : vector<8x128xi1>, vector<8x128xi32>
      %17 = arith.sitofp %16 : vector<8x128xi32> to vector<8x128xf32>
      %cst_9 = arith.constant -0.614022672 : f32
      %18 = vector.broadcast %cst_9 : f32 to vector<8x128xf32>
      %19 = arith.mulf %17, %18 : vector<8x128xf32>
      %20 = math.exp %19 : vector<8x128xf32>
      %c0_10 = arith.constant 0 : index
      %c0_11 = arith.constant 0 : index
      %21 = vector.load %arg1[%c0_10, %c0_11] : memref<8x128xf32, #tpu.memory_space<vmem>>, vector<8x1xf32>
      %22 = vector.broadcast %21 : vector<8x1xf32> to vector<8x128xf32>
      %23 = arith.mulf %22, %20 : vector<8x128xf32>
      %c16_i32_12 = arith.constant 16 : i32
      %24 = vector.broadcast %c16_i32_12 : i32 to vector<8x128xi32>
      %25 = arith.cmpi slt, %11, %24 : vector<8x128xi32>
      %cst_13 = arith.constant 0.000000e+00 : f32
      %cst_14 = arith.constant 1.57079637 : f32
      %26 = vector.broadcast %cst_13 : f32 to vector<8x128xf32>
      %27 = vector.broadcast %cst_14 : f32 to vector<8x128xf32>
      %28 = arith.select %25, %26, %27 : vector<8x128xi1>, vector<8x128xf32>
      %29 = arith.addf %23, %28 : vector<8x128xf32>
      %30 = math.sin %29 : vector<8x128xf32>
      %c32_i32 = arith.constant 32 : i32
      %31 = vector.broadcast %c32_i32 : i32 to vector<8x128xi32>
      %32 = arith.cmpi slt, %11, %31 : vector<8x128xi32>
      %cst_15 = arith.constant 0.000000e+00 : f32
      %33 = vector.broadcast %cst_15 : f32 to vector<8x128xf32>
      %34 = arith.select %32, %30, %33 : vector<8x128xi1>, vector<8x128xf32>
      %35 = arith.truncf %34 : vector<8x128xf32> to vector<8x128xbf16>
      %c0_16 = arith.constant 0 : index
      %c0_17 = arith.constant 0 : index
      %36 = vector.load %arg2[%c0_16, %c0_17] : memref<128x256xbf16, #tpu.memory_space<vmem>>, vector<128x256xbf16>
      %cst_18 = arith.constant dense<0.000000e+00> : vector<8x256xf32>
      %37 = tpu.matmul %35, %36, %cst_18 {dimension_numbers = #tpu.dot_dimension_numbers<[1], [0], [0], [1], [0, 0, 1, 1], [], []>} : vector<8x128xbf16>, vector<128x256xbf16>, vector<8x256xf32> -> vector<8x256xf32>
      %c0_19 = arith.constant 0 : index
      %c0_20 = arith.constant 0 : index
      %38 = vector.load %arg3[%c0_19, %c0_20] : memref<1x256xf32, #tpu.memory_space<vmem>>, vector<1x256xf32>
      %39 = vector.broadcast %38 : vector<1x256xf32> to vector<8x256xf32>
      %40 = arith.addf %37, %39 : vector<8x256xf32>
      %41 = arith.negf %40 : vector<8x256xf32>
      %42 = math.exp %41 : vector<8x256xf32>
      %cst_21 = arith.constant 1.000000e+00 : f32
      %43 = vector.broadcast %cst_21 : f32 to vector<8x256xf32>
      %44 = arith.addf %43, %42 : vector<8x256xf32>
      %45 = arith.divf %43, %44 : vector<8x256xf32>
      %46 = arith.mulf %40, %45 : vector<8x256xf32>
      %c0_22 = arith.constant 0 : index
      %c0_23 = arith.constant 0 : index
      %47 = vector.load %arg7[%c0_22, %c0_23] : memref<8x256xf32, #tpu.memory_space<vmem>>, vector<8x256xf32>
      tpu.vector_store %arg7[%c0_22, %c0_23], %46 {strides = array<i32>} : memref<8x256xf32, #tpu.memory_space<vmem>>, vector<8x256xf32>,
    } else {
    }
    %c0 = arith.constant 0 : index
    %c0_1 = arith.constant 0 : index
    %3 = vector.load %arg7[%c0, %c0_1] : memref<8x256xf32, #tpu.memory_space<vmem>>, vector<8x256xf32>
    %4 = arith.truncf %3 : vector<8x256xf32> to vector<8x256xbf16>
    %c0_2 = arith.constant 0 : index
    %c0_3 = arith.constant 0 : index
    %5 = vector.load %arg4[%c0_2, %c0_3] : memref<256x128xbf16, #tpu.memory_space<vmem>>, vector<256x128xbf16>
    %cst = arith.constant dense<0.000000e+00> : vector<8x128xf32>
    %6 = tpu.matmul %4, %5, %cst {dimension_numbers = #tpu.dot_dimension_numbers<[1], [0], [0], [1], [0, 0, 1, 1], [], []>} : vector<8x256xbf16>, vector<256x128xbf16>, vector<8x128xf32> -> vector<8x128xf32>
    %c0_4 = arith.constant 0 : index
    %c0_5 = arith.constant 0 : index
    %7 = vector.load %arg5[%c0_4, %c0_5] : memref<1x128xf32, #tpu.memory_space<vmem>>, vector<1x128xf32>
    %8 = vector.broadcast %7 : vector<1x128xf32> to vector<8x128xf32>
    %9 = arith.addf %6, %8 : vector<8x128xf32>
    %c0_6 = arith.constant 0 : index
    %c0_7 = arith.constant 0 : index
    %10 = vector.load %arg6[%c0_6, %c0_7] : memref<8x128xf32, #tpu.memory_space<vmem>>, vector<8x128xf32>
    tpu.vector_store %arg6[%c0_6, %c0_7], %9 {strides = array<i32>} : memref<8x128xf32, #tpu.memory_space<vmem>>, vector<8x128xf32>,
    return
  }
  func.func @transform_0(%arg0: i32) -> (i32, i32) {
    %c0_i32 = arith.constant 0 : i32
    %c0_i32_0 = arith.constant 0 : i32
    %c0_i32_1 = arith.constant 0 : i32
    return %c0_i32, %c0_i32_0 : i32, i32
  }
  func.func @transform_1(%arg0: i32) -> (i32, i32) {
    %c0_i32 = arith.constant 0 : i32
    %c0_i32_0 = arith.constant 0 : i32
    %c0_i32_1 = arith.constant 0 : i32
    return %c0_i32, %c0_i32_0 : i32, i32
  }
  func.func @transform_2(%arg0: i32) -> (i32, i32) {
    %c0_i32 = arith.constant 0 : i32
    %c0_i32_0 = arith.constant 0 : i32
    %c0_i32_1 = arith.constant 0 : i32
    return %c0_i32, %c0_i32_0 : i32, i32
  }
  func.func @transform_3(%arg0: i32) -> (i32, i32) {
    %c0_i32 = arith.constant 0 : i32
    %c0_i32_0 = arith.constant 0 : i32
    return %c0_i32, %arg0 : i32, i32
  }
  func.func @transform_4(%arg0: i32) -> (i32, i32) {
    %c0_i32 = arith.constant 0 : i32
    %c0_i32_0 = arith.constant 0 : i32
    return %c0_i32, %arg0 : i32, i32
  }
  func.func @transform_5(%arg0: i32) -> (i32, i32) {
    %c0_i32 = arith.constant 0 : i32
    %c0_i32_0 = arith.constant 0 : i32
    return %c0_i32, %arg0 : i32, i32
  }
}

</mosaic_0001>

<llo_original>
// kernel: tpu_custom_call.1
$region0: #{tpu_custom_call.1}
  #allocation0 [shape = 'u32[]', space=smem, size = 0x4, offset = 0x4, fixed_abs, tag = 'smem constant byte address 0x4 - core index']
  #allocation1 [shape = 'u32[144,128]{1,0:T(1,128)}', space=vmem, size = 0x12000, scoped, tag = 'internal scratch']
  #allocation2 [shape = 'f32[8,256]{1,0:T(8,128)}', space=vmem, size = 0x2000, scoped, tag = 'scratch operand']
  %s0 = inlined_call_operand.hbm [shape: f32[8,128], index: 0, kind: input, shape index: {}]
  %s1 = inlined_call_operand.hbm [shape: bf16[128,256], index: 1, kind: input, shape index: {}]
  %s2 = inlined_call_operand.vmem [shape: f32[1,256], index: 2, kind: input, shape index: {}]
  %s3 = inlined_call_operand.hbm [shape: bf16[256,256], index: 3, kind: input, shape index: {}]
  %s4 = inlined_call_operand.vmem [shape: f32[1,256], index: 4, kind: input, shape index: {}]
  %s5 = inlined_call_operand.hbm [shape: f32[8,256], index: 5, kind: output, shape index: {}]
  %s6 = sld [smem:[#allocation0]]
  $region69: #{tpu_custom_call.1} parent=0
    _
  %s8 = ssub.s32 1, %s6
  %s9 = scalar_select 0, %s8, %s6
  $region1: #{tpu_custom_call.1} parent=0
    #allocation3 [shape = 'u8[4096]{0}', space=vmem, size = 0x1000, scoped, tag = 'input window, operand 0, single buffered']
    #allocation4 [shape = 's32[2]{0}', space=sflag, size = 0x8, scoped, tag = 'scoped memory for tpu_custom_call.1']
    #allocation5 [shape = 's32[2]{0}', space=sflag, size = 0x8, scoped, tag = 'scoped memory for tpu_custom_call.1']
    #allocation6 [shape = 'u8[65536]{0}', space=vmem, size = 0x10000, scoped, tag = 'input window, operand 1, single buffered']
    #allocation7 [shape = 's32[1]{0}', space=sflag, size = 0x4, scoped, tag = 'scoped memory for tpu_custom_call.1']
    #allocation8 [shape = 'u8[131072]{0}', space=vmem, size = 0x20000, scoped, tag = 'input window, operand 3']
    #allocation9 [shape = 'u8[8192]{0}', space=vmem, size = 0x2000, scoped, tag = 'output window, operand 0']
    %10 = vsyncpa [#allocation4], 0
    %11 = vsyncpa [#allocation7], 0
    %12 = vsyncpa [#allocation5], 0
    %s13 = scalar_lea.sflag [#allocation5], 1
    %14 = vsyncpa %s13, 0
    loop: start=0, step=1, limit=4
    $region2: #{tpu_custom_call.1} parent=1 // loop_pre_header
      _
    $region3: #{tpu_custom_call.1} parent=1 // loop_header
      %s16 = sphi 0, %s20
      %p17 = scmp.ge.s32.totalorder %s16, 4
      %s24 = sphi 0, %s24
      %s26 = sphi 0, %s24
      %s27 = sphi 0, %s26
      %s41 = sphi 0, %s27
      %s45 = sphi 0, %s45
      %s47 = sphi 0, %s45
      %s48 = sphi 0, %s47
      %s62 = sphi 0, %s48
      %s66 = sphi 0, %s66
      %s68 = sphi 0, %s66
      %s69 = sphi 0, %s68
      %s83 = sphi 0, %s69
      %s89 = sphi 0, %s91
      %s92 = sphi 0, %s89
      %s93 = sphi 0, %s92
      %s109 = sphi 0, %s93
      %s115 = sphi 0, %s117
      %s118 = sphi 0, %s115
      %s119 = sphi 0, %s118
      %s135 = sphi 0, %s119
      %s141 = sphi 0, %s143
      %s144 = sphi 0, %s141
      %s145 = sphi 0, %s144
      %s161 = sphi 0, %s145
    $region4: #{tpu_custom_call.1} parent=1 // loop_header_branch
      %19 = sbr.rel (%p17) target = $region8
    $region5: #{tpu_custom_call.1} parent=1 // loop_body
      %s21 = ssub.s32 %s16, 1
      %s22 = ssub.s32 %s16, 2
      %s23 = sadd.s32 %s16, 1
      %s25 = sadd.s32 %s24, 1
      %p28 = scmp.eq.s32.totalorder %s16, 1
      %p29 = scmp.ne.s32.totalorder %s24, %s26
      %p30 = scmp.eq.s32.totalorder %s16, 0
      %p31 = por %p29, %p30
      %p32 = scmp.ne.s32.totalorder %s24, %s26
      %p33 = scmp.eq.s32.totalorder %s21, 1
      %p34 = por %p32, %p33
      %p35 = scmp.ne.s32.totalorder %s26, %s27
      %p36 = scmp.eq.s32.totalorder %s21, 0
      %p37 = por %p35, %p36
      %p38 = scmp.ne.s32.totalorder %s26, %s27
      %p39 = scmp.eq.s32.totalorder %s22, 1
      %p40 = por %p38, %p39
      %p42 = scmp.ne.s32.totalorder %s27, %s41
      %p43 = scmp.eq.s32.totalorder %s22, 0
      %p44 = por %p42, %p43
      %s46 = sadd.s32 %s45, 1
      %p49 = scmp.eq.s32.totalorder %s16, 1
      %p50 = scmp.ne.s32.totalorder %s45, %s47
      %p51 = scmp.eq.s32.totalorder %s16, 0
      %p52 = por %p50, %p51
      %p53 = scmp.ne.s32.totalorder %s45, %s47
      %p54 = scmp.eq.s32.totalorder %s21, 1
      %p55 = por %p53, %p54
      %p56 = scmp.ne.s32.totalorder %s47, %s48
      %p57 = scmp.eq.s32.totalorder %s21, 0
      %p58 = por %p56, %p57
      %p59 = scmp.ne.s32.totalorder %s47, %s48
      %p60 = scmp.eq.s32.totalorder %s22, 1
      %p61 = por %p59, %p60
      %p63 = scmp.ne.s32.totalorder %s48, %s62
      %p64 = scmp.eq.s32.totalorder %s22, 0
      %p65 = por %p63, %p64
      %s67 = sadd.s32 %s66, 1
      %p70 = scmp.eq.s32.totalorder %s16, 1
      %p71 = scmp.ne.s32.totalorder %s66, %s68
      %p72 = scmp.eq.s32.totalorder %s16, 0
      %p73 = por %p71, %p72
      %p74 = scmp.ne.s32.totalorder %s66, %s68
      %p75 = scmp.eq.s32.totalorder %s21, 1
      %p76 = por %p74, %p75
      %p77 = scmp.ne.s32.totalorder %s68, %s69
      %p78 = scmp.eq.s32.totalorder %s21, 0
      %p79 = por %p77, %p78
      %p80 = scmp.ne.s32.totalorder %s68, %s69
      %p81 = scmp.eq.s32.totalorder %s22, 1
      %p82 = por %p80, %p81
      %p84 = scmp.ne.s32.totalorder %s69, %s83
      %p85 = scmp.eq.s32.totalorder %s22, 0
      %p86 = por %p84, %p85
      %s87 = ssub.s32 %s16, %s23
      %p88 = scmp.eq.s32.totalorder %s87, 0
      %s90 = sadd.s32 %s89, 1
      %s91 = scalar_select %p88, %s89, %s90
      %p94 = pneg %p88
      %p95 = scmp.eq.s32.totalorder %s16, 1
      %p96 = por %p94, %p95
      %p97 = scmp.ne.s32.totalorder %s89, %s92
      %p98 = scmp.eq.s32.totalorder %s16, 0
      %p99 = por %p97, %p98
      %p100 = scmp.ne.s32.totalorder %s89, %s92
      %p101 = scmp.eq.s32.totalorder %s21, 1
      %p102 = por %p100, %p101
      %p103 = scmp.ne.s32.totalorder %s92, %s93
      %p104 = scmp.eq.s32.totalorder %s21, 0
      %p105 = por %p103, %p104
      %p106 = scmp.ne.s32.totalorder %s92, %s93
      %p107 = scmp.eq.s32.totalorder %s22, 1
      %p108 = por %p106, %p107
      %p110 = scmp.ne.s32.totalorder %s93, %s109
      %p111 = scmp.eq.s32.totalorder %s22, 0
      %p112 = por %p110, %p111
      %s113 = ssub.s32 %s16, %s23
      %p114 = scmp.eq.s32.totalorder %s113, 0
      %s116 = sadd.s32 %s115, 1
      %s117 = scalar_select %p114, %s115, %s116
      %p120 = pneg %p114
      %p121 = scmp.eq.s32.totalorder %s16, 1
      %p122 = por %p120, %p121
      %p123 = scmp.ne.s32.totalorder %s115, %s118
      %p124 = scmp.eq.s32.totalorder %s16, 0
      %p125 = por %p123, %p124
      %p126 = scmp.ne.s32.totalorder %s115, %s118
      %p127 = scmp.eq.s32.totalorder %s21, 1
      %p128 = por %p126, %p127
      %p129 = scmp.ne.s32.totalorder %s118, %s119
      %p130 = scmp.eq.s32.totalorder %s21, 0
      %p131 = por %p129, %p130
      %p132 = scmp.ne.s32.totalorder %s118, %s119
      %p133 = scmp.eq.s32.totalorder %s22, 1
      %p134 = por %p132, %p133
      %p136 = scmp.ne.s32.totalorder %s119, %s135
      %p137 = scmp.eq.s32.totalorder %s22, 0
      %p138 = por %p136, %p137
      %s139 = ssub.s32 %s16, %s23
      %p140 = scmp.eq.s32.totalorder %s139, 0
      %s142 = sadd.s32 %s141, 1
      %s143 = scalar_select %p140, %s141, %s142
      %p146 = pneg %p140
      %p147 = scmp.eq.s32.totalorder %s16, 1
      %p148 = por %p146, %p147
      %p149 = scmp.ne.s32.totalorder %s141, %s144
      %p150 = scmp.eq.s32.totalorder %s16, 0
      %p151 = por %p149, %p150
      %p152 = scmp.ne.s32.totalorder %s141, %s144
      %p153 = scmp.eq.s32.totalorder %s21, 1
      %p154 = por %p152, %p153
      %p155 = scmp.ne.s32.totalorder %s144, %s145
      %p156 = scmp.eq.s32.totalorder %s21, 0
      %p157 = por %p155, %p156
      %p158 = scmp.ne.s32.totalorder %s144, %s145
      %p159 = scmp.eq.s32.totalorder %s22, 1
      %p160 = por %p158, %p159
      %p162 = scmp.ne.s32.totalorder %s145, %s161
      %p163 = scmp.eq.s32.totalorder %s22, 0
      %p164 = por %p162, %p163
      %p165 = scmp.le.s32.totalorder 1, %s16
      %p166 = scmp.lt.s32.totalorder %s16, 3
      %p167 = pnand %p165, %p166
      %p168 = pneg %p167
      // Predicated region
      $region9: #{tpu_custom_call.1} parent=5 // pred_check
        _
      $region10: #{tpu_custom_call.1} parent=5 // pred_check_branch
        %170 = sbr.rel (%p167) target = $region12
      $region11: #{tpu_custom_call.1} parent=5 // pred_region
        %s171 = ssub.s32 %s16, 1
        // Predicated region
        $region13: #{tpu_custom_call.1} parent=11 // pred_check
          %p172 = pneg %p37
        $region14: #{tpu_custom_call.1} parent=11 // pred_check_branch
          %174 = sbr.rel (%p172) target = $region16
        $region15: #{tpu_custom_call.1} parent=11 // pred_region
          %s176 = ssub.s32 128, 128
          %177 = vsyncadd [#allocation4], %s176
          %s179 = sshll.u32 [#allocation3], 4
          %s180 = int_to_ptr.vmem [resolvable:$true] %s179
          %182 = dma.hbm_to_vmem [thread:$0]  %s0, 128, %s180, [#allocation4]
        $region16: #{tpu_custom_call.1} parent=11 // pred_fallthru
          _
        // Predicated region
        $region17: #{tpu_custom_call.1} parent=11 // pred_check
          %p183 = pneg %p58
        $region18: #{tpu_custom_call.1} parent=11 // pred_check_branch
          %185 = sbr.rel (%p183) target = $region20
        $region19: #{tpu_custom_call.1} parent=11 // pred_region
          %s187 = ssub.s32 2048, 2048
          %188 = vsyncadd [#allocation7], %s187
          %s189 = sshll.u32 [#allocation6], 4
          %s190 = int_to_ptr.vmem [resolvable:$true] %s189
          %195 = dma.hbm_to_vmem [thread:$0]  %s1, 2048, %s190, [#allocation7], 128, 128, 8
        $region20: #{tpu_custom_call.1} parent=11 // pred_fallthru
          _
        // Predicated region
        $region21: #{tpu_custom_call.1} parent=11 // pred_check
          %p196 = pneg %p79
        $region22: #{tpu_custom_call.1} parent=11 // pred_check_branch
          %198 = sbr.rel (%p196) target = $region24
        $region23: #{tpu_custom_call.1} parent=11 // pred_region
          _
        $region24: #{tpu_custom_call.1} parent=11 // pred_fallthru
          _
      $region12: #{tpu_custom_call.1} parent=5 // pred_fallthru
        _
      %p199 = scmp.lt.s32.totalorder %s16, 2
      // Predicated region
      $region25: #{tpu_custom_call.1} parent=5 // pred_check
        %p200 = pneg %p199
      $region26: #{tpu_custom_call.1} parent=5 // pred_check_branch
        %202 = sbr.rel (%p200) target = $region28
      $region27: #{tpu_custom_call.1} parent=5 // pred_region
        // Predicated region
        $region29: #{tpu_custom_call.1} parent=27 // pred_check
          %p203 = pneg %p99
        $region30: #{tpu_custom_call.1} parent=27 // pred_check_branch
          %205 = sbr.rel (%p203) target = $region32
        $region31: #{tpu_custom_call.1} parent=27 // pred_region
          %s206 = sand.u32 %s16, 1
          %s207 = scalar_lea.sflag [#allocation4], %s206
          %s208 = sand.u32 %s89, 1
          %s209 = smul.addr %s208, 128
          %s210 = scalar_lea.vmem [#allocation8], %s209
          %s212 = ssub.s32 2048, 2048
          %213 = vsyncadd %s207, %s212
          %s214 = smul.addr %s16, 64
          %s215 = scalar_lea.hbm %s3, %s214
          %s216 = sshll.u32 %s210, 4
          %s217 = int_to_ptr.vmem [resolvable:$true] %s216
          %222 = dma.hbm_to_vmem [thread:$0]  %s215, 2048, %s217, %s207, 128, 64, 4
        $region32: #{tpu_custom_call.1} parent=27 // pred_fallthru
          _
        // Predicated region
        $region33: #{tpu_custom_call.1} parent=27 // pred_check
          %p223 = pneg %p125
        $region34: #{tpu_custom_call.1} parent=27 // pred_check_branch
          %225 = sbr.rel (%p223) target = $region36
        $region35: #{tpu_custom_call.1} parent=27 // pred_region
          %p226 = scmp.lt.s32.totalorder %s16, 1
          %s227 = scalar_select %p226, %s16, 1
          %s228 = scalar_lea.vmem %s4, %s227
        $region36: #{tpu_custom_call.1} parent=27 // pred_fallthru
          _
      $region28: #{tpu_custom_call.1} parent=5 // pred_fallthru
        _
      %p229 = scmp.le.s32.totalorder 1, %s16
      %p230 = scmp.lt.s32.totalorder %s16, 3
      %p231 = pnand %p229, %p230
      %p232 = pneg %p231
      // Predicated region
      $region37: #{tpu_custom_call.1} parent=5 // pred_check
        _
      $region38: #{tpu_custom_call.1} parent=5 // pred_check_branch
        %234 = sbr.rel (%p231) target = $region40
      $region39: #{tpu_custom_call.1} parent=5 // pred_region
        %s235 = ssub.s32 %s16, 1
        // Predicated region
        $region41: #{tpu_custom_call.1} parent=39 // pred_check
          %p236 = pneg %p37
        $region42: #{tpu_custom_call.1} parent=39 // pred_check_branch
          %238 = sbr.rel (%p236) target = $region44
        $region43: #{tpu_custom_call.1} parent=39 // pred_region
          %239 = dma.done [#allocation4], 128
        $region44: #{tpu_custom_call.1} parent=39 // pred_fallthru
          _
        // Predicated region
        $region45: #{tpu_custom_call.1} parent=39 // pred_check
          %p240 = pneg %p58
        $region46: #{tpu_custom_call.1} parent=39 // pred_check_branch
          %242 = sbr.rel (%p240) target = $region48
        $region47: #{tpu_custom_call.1} parent=39 // pred_region
          %243 = dma.done [#allocation7], 2048
        $region48: #{tpu_custom_call.1} parent=39 // pred_fallthru
          _
        %s244 = sand.u32 %s21, 1
        %s245 = scalar_lea.sflag [#allocation4], %s244
        %s246 = sand.u32 %s92, 1
        %s247 = smul.addr %s246, 128
        %s248 = scalar_lea.vmem [#allocation8], %s247
        // Predicated region
        $region49: #{tpu_custom_call.1} parent=39 // pred_check
          %p249 = pneg %p105
        $region50: #{tpu_custom_call.1} parent=39 // pred_check_branch
          %251 = sbr.rel (%p249) target = $region52
        $region51: #{tpu_custom_call.1} parent=39 // pred_region
          %252 = dma.done %s245, 2048
        $region52: #{tpu_custom_call.1} parent=39 // pred_fallthru
          _
        %p253 = pneg %p37
        %p254 = pneg %p34
        %p255 = pneg %p58
        %p256 = pneg %p55
        %p257 = pneg %p79
        %p258 = pneg %p76
        %s259 = sand.u32 %s21, 1
        %s260 = scalar_lea.sflag [#allocation4], %s259
        %s261 = sand.u32 %s92, 1
        %s262 = smul.addr %s261, 128
        %s263 = scalar_lea.vmem [#allocation8], %s262
        %p264 = pneg %p105
        %p265 = pneg %p102
        %p266 = scmp.lt.s32.totalorder %s21, 1
        %s267 = scalar_select %p266, %s21, 1
        %s268 = scalar_lea.vmem %s4, %s267
        %p269 = pneg %p131
        %p270 = pneg %p128
        %p271 = pneg %p157
        %p272 = pneg %p154
        %s273 = sand.u32 %s144, 1
        %s274 = scalar_lea.sflag [#allocation5], %s273
        %s275 = sand.u32 %s144, 1
        %s276 = smul.addr %s275, 8
        %s277 = scalar_lea.vmem [#allocation9], %s276
        %p278 = scmp.lt.s32.totalorder %s21, 1
        %s279 = scalar_select %p278, %s21, 1
        %s280 = scalar_lea.vmem %s4, %s279
        %p282 = scmp.eq.s32.totalorder %s21, 0
        // Predicated region
        $region53: #{tpu_custom_call.1} parent=39 // pred_check
          %p283 = pneg %p282
        $region54: #{tpu_custom_call.1} parent=39 // pred_check_branch
          %285 = sbr.rel (%p283) target = $region56
        $region55: #{tpu_custom_call.1} parent=39 // pred_region
          %v286 = vlaneseq
          %v287 = vand.u32 %v286, 127
          %vm288 = vcmp.lt.s32.totalorder %v287, 16
          %v289 = vsub.s32 %v287, 16
          %v290 = vsel %vm288, %v287, %v289
          %v291 = vcvt.s32.f32 %v290
          %v292 = vmul.f32 %v291, -0.6140227
          %v293 = vmul.f32 %v292, 1.442695
          %v294 = vpow.pop %v293
          %v295 = vld [vmem:[#allocation3] sm:$0xff]
          %297 = vset.pattern.permute.xlu0 0
          %298 = vperm.xlu0 %297, %v295
          %v299 = vpop.permute.xlu0 %298
          %v301 = vmul.f32 %v299, %v294
          %v302 = vsel %vm288, 0.0, 1.5707964
          %v303 = vadd.f32 %v301, %v302
          %v304 = vand.u32 2147483647, %v303
          %vm305 = vcmp.le.f32.partialorder %v304, 0.7853982
          %vm306 = vcmp.lt.s32.totalorder %v303, 0
          %v307 = vand.u32 %v303, 2139095040
          %v308 = vshrl.u32 %v307, 23
          %v309 = vsub.s32 %v308, 127
          %v310 = vand.u32 2147483647, %v303
          %v311 = vand.u32 %v310, 8388607
          %v312 = vor.u32 %v311, 8388608
          %v313 = vsub.s32 0, %v312
          %v314 = vadd.s32 %v309, 1
          %vm315 = vcmp.gt.s32.totalorder %v314, 0
          %v316 = vsel %vm315, %v314, 0
          %v317 = vshrl.u32 %v316, 5
          %v318 = vand.u32 %v316, 31
          %v319 = vsub.s32 32, %v318
          %v320 = vshrl.u32 683565275, %v319
          %v321 = vshll.u32 683565275, %v318
          %v322 = vshrl.u32 2475754826, %v319
          %v323 = vor.u32 %v321, %v322
          %v324 = vshll.u32 2475754826, %v318
          %v325 = vshrl.u32 2131351028, %v319
          %v326 = vor.u32 %v324, %v325
          %v327 = vshll.u32 2131351028, %v318
          %v328 = vshrl.u32 2102212464, %v319
          %v329 = vor.u32 %v327, %v328
          %v330 = vshll.u32 2102212464, %v318
          %v331 = vshrl.u32 920167782, %v319
          %v332 = vor.u32 %v330, %v331
          %v333 = vshll.u32 920167782, %v318
          %v334 = vshrl.u32 1326507024, %v319
          %v335 = vor.u32 %v333, %v334
          %vm336 = vcmp.lt.s32.totalorder %v317, 1
          %vm337 = vcmp.lt.s32.totalorder %v317, 2
          %vm338 = vcmp.lt.s32.totalorder %v317, 3
          %vm339 = vcmp.lt.s32.totalorder %v317, 4
          %v340 = vsel %vm336, %v320, %v323
          %v341 = vsel %vm339, %v329, 2102212464
          %v342 = vsel %vm338, %v326, %v341
          %v343 = vsel %vm337, %v340, %v342
          %v344 = vsel %vm336, %v323, %v326
          %v345 = vsel %vm339, %v332, 920167782
          %v346 = vsel %vm338, %v329, %v345
          %v347 = vsel %vm337, %v344, %v346
          %v348 = vsel %vm336, %v326, %v329
          %v349 = vsel %vm339, %v335, 1326507024
          %v350 = vsel %vm338, %v332, %v349
          %v351 = vsel %vm337, %v348, %v350
          %v352 = vshll.u32 %v312, 8
          %v353 = vmul.u32.u64.compose %v352, %v351
          %v354 = vextract.low.u32 %v353
          %v355 = vextract.high.u32 %v353
          %v356 = vmul.u32.u64.compose %v352, %v347
          %v357 = vextract.low.u32 %v356
          %v358 = vextract.high.u32 %v356
          %v359 = vmul.u32 %v352, %v343
          %v360 = vadd.s32 %v355, %v357
          %vm361 = vc.u32 %v355, %v357
          %v362 = vadd.s32 %v358, 1
          %v363 = vsel %vm361, %v362, %v358
          %v364 = vadd.s32 %v359, %v363
          %v365 = vadd.s32 %v364, 536870912
          %v366 = vshrl.u32 %v365, 30
          %v367 = vshll.u32 %v366, 30
          %v368 = vsub.s32 %v364, %v367
          %vm369 = vcmp.lt.s32.totalorder %v368, 0
          %v370 = vsub.s32 0, %v368
          %v371 = vsel %vm369, %v370, %v368
          %v372 = vclz %v371
          %v373 = vsub.s32 %v372, 2
          %vm374 = vcmp.gt.s32.totalorder 0, %v373
          %v375 = vsel %vm374, 0, %v373
          %v376 = vsub.s32 32, %v375
          %v377 = vshll.u32 %v368, %v375
          %v378 = vshrl.u32 %v360, %v376
          %v379 = vor.u32 %v377, %v378
          %v380 = vsub.s32 4294967266, %v375
          %v381 = vadd.s32 %v380, 127
          %v382 = vshll.u32 %v381, 23
          %v383 = vor.u32 4788187, %v382
          %v384 = vand.u32 2147483647, %v383
          %v386 = vcvt.s32.f32 %v379
          %v387 = vmul.f32 %v386, %v384
          %v388 = vxor.u32 %v387, 2147483648
          %v389 = vsel %vm306, %v388, %v387
          %v390 = vsub.s32 4, %v366
          %v391 = vsel %vm306, %v390, %v366
          %v392 = vsel %vm305, %v303, %v389
          %v393 = vsel %vm305, 0, %v391
          %v394 = vcosq.f32.pop %v392
          %v395 = vsinq.f32.pop %v392
          %vm396 = vweird.f32 %v303
          %v397 = vadd.s32 %v393, 3
          %v398 = vand.u32 %v397, 3
          %vm399 = vcmp.lt.s32.totalorder %v398, 2
          %vm400 = vcmp.eq.s32.totalorder %v398, 0
          %v401 = vxor.u32 %v395, 2147483648
          %v402 = vsel %vm400, %v394, %v401
          %vm403 = vcmp.eq.s32.totalorder %v398, 2
          %v404 = vxor.u32 %v394, 2147483648
          %v405 = vsel %vm403, %v404, %v395
          %v406 = vsel %vm399, %v402, %v405
          %v407 = vsel %vm396, nan, %v406
          %vm408 = vcmp.lt.s32.totalorder %v287, 32
          %v409 = vsel %vm408, %v407, 0.0
          %v410 = vpack.c.bf16 %v409, %v409
          %v411 = vld [vmem:[#allocation6] sm:$0xff]
          %v412 = vld [vmem:[#allocation6 + $0x8] sm:$0xff]
          %v413 = vld [vmem:[#allocation6 + $0x10] sm:$0xff]
          %v414 = vld [vmem:[#allocation6 + $0x18] sm:$0xff]
          %v415 = vld [vmem:[#allocation6 + $0x20] sm:$0xff]
          %v416 = vld [vmem:[#allocation6 + $0x28] sm:$0xff]
          %v417 = vld [vmem:[#allocation6 + $0x30] sm:$0xff]
          %v418 = vld [vmem:[#allocation6 + $0x38] sm:$0xff]
          %v419 = vld [vmem:[#allocation6 + $0x40] sm:$0xff]
          %v420 = vld [vmem:[#allocation6 + $0x48] sm:$0xff]
          %v421 = vld [vmem:[#allocation6 + $0x50] sm:$0xff]
          %v422 = vld [vmem:[#allocation6 + $0x58] sm:$0xff]
          %v423 = vld [vmem:[#allocation6 + $0x60] sm:$0xff]
          %v424 = vld [vmem:[#allocation6 + $0x68] sm:$0xff]
          %v425 = vld [vmem:[#allocation6 + $0x70] sm:$0xff]
          %v426 = vld [vmem:[#allocation6 + $0x78] sm:$0xff]
          %v427 = vld [vmem:[%s2] sm:$0x3]
          %v429 = vlaneseq
          %v430 = vshrl.u32 %v429, 7
          %v431 = vsub.s32 0, %v430
          %v432 = vrot.slane %v427, %v431
          %v433 = vlaneseq
          %v434 = vshrl.u32 %v433, 7
          %v435 = vsub.s32 1, %v434
          %v436 = vrot.slane %v427, %v435
          %v455 = vunpack.c.l.b16 %v411
          %v456 = vunpack.c.h.b16 %v411
          %v457 = vunpack.c.l.b16 %v412
          %v458 = vunpack.c.h.b16 %v412
          %v459 = vunpack.c.l.b16 %v413
          %v460 = vunpack.c.h.b16 %v413
          %v461 = vunpack.c.l.b16 %v414
          %v462 = vunpack.c.h.b16 %v414
          %v463 = vunpack.c.l.b16 %v415
          %v464 = vunpack.c.h.b16 %v415
          %v465 = vunpack.c.l.b16 %v416
          %v466 = vunpack.c.h.b16 %v416
          %v467 = vunpack.c.l.b16 %v417
          %v468 = vunpack.c.h.b16 %v417
          %v469 = vunpack.c.l.b16 %v418
          %v470 = vunpack.c.h.b16 %v418
          %v471 = vunpack.c.l.b16 %v419
          %v472 = vunpack.c.h.b16 %v419
          %v473 = vunpack.c.l.b16 %v420
          %v474 = vunpack.c.h.b16 %v420
          %v475 = vunpack.c.l.b16 %v421
          %v476 = vunpack.c.h.b16 %v421
          %v477 = vunpack.c.l.b16 %v422
          %v478 = vunpack.c.h.b16 %v422
          %v479 = vunpack.c.l.b16 %v423
          %v480 = vunpack.c.h.b16 %v423
          %v481 = vunpack.c.l.b16 %v424
          %v482 = vunpack.c.h.b16 %v424
          %v483 = vunpack.c.l.b16 %v425
          %v484 = vunpack.c.h.b16 %v425
          %v485 = vunpack.c.l.b16 %v426
          %v486 = vunpack.c.h.b16 %v426
          %v487 = vpack.c.b16 %v457, %v455
          %v488 = vpack.c.b16 %v458, %v456
          %v489 = vpack.c.b16 %v461, %v459
          %v490 = vpack.c.b16 %v462, %v460
          %v491 = vpack.c.b16 %v465, %v463
          %v492 = vpack.c.b16 %v466, %v464
          %v493 = vpack.c.b16 %v469, %v467
          %v494 = vpack.c.b16 %v470, %v468
          %v495 = vpack.c.b16 %v473, %v471
          %v496 = vpack.c.b16 %v474, %v472
          %v497 = vpack.c.b16 %v477, %v475
          %v498 = vpack.c.b16 %v478, %v476
          %v499 = vpack.c.b16 %v481, %v479
          %v500 = vpack.c.b16 %v482, %v480
          %v501 = vpack.c.b16 %v485, %v483
          %v502 = vpack.c.b16 %v486, %v484
          %519 = vmatprep.subr.bf16.mxu0 %v488
          %520 = vmatpush1.bf16.msra.mxu0 %v487
          %521 = vmatprep.subr.bf16.mxu0 %v490
          %522 = vmatpush1.bf16.msra.mxu0 %v489
          %523 = vmatprep.subr.bf16.mxu0 %v492
          %524 = vmatpush1.bf16.msra.mxu0 %v491
          %525 = vmatprep.subr.bf16.mxu0 %v494
          %526 = vmatpush1.bf16.msra.mxu0 %v493
          %527 = vmatprep.subr.bf16.mxu0 %v496
          %528 = vmatpush1.bf16.msra.mxu0 %v495
          %529 = vmatprep.subr.bf16.mxu0 %v498
          %530 = vmatpush1.bf16.msra.mxu0 %v497
          %531 = vmatprep.subr.bf16.mxu0 %v500
          %532 = vmatpush1.bf16.msra.mxu0 %v499
          %533 = vmatprep.subr.bf16.mxu0 %v502
          %534 = vmatpush1.bf16.msra.mxu0 %v501
          %535 = vmatprep.subr.bf16.mxu0 0
          %536 = vmatpush1.bf16.msra.mxu0 0
          %537 = vmatprep.subr.bf16.mxu0 0
          %538 = vmatpush1.bf16.msra.mxu0 0
          %539 = vmatprep.subr.bf16.mxu0 0
          %540 = vmatpush1.bf16.msra.mxu0 0
          %541 = vmatprep.subr.bf16.mxu0 0
          %542 = vmatpush1.bf16.msra.mxu0 0
          %543 = vmatprep.subr.bf16.mxu0 0
          %544 = vmatpush1.bf16.msra.mxu0 0
          %545 = vmatprep.subr.bf16.mxu0 0
          %546 = vmatpush1.bf16.msra.mxu0 0
          %547 = vmatprep.subr.bf16.mxu0 0
          %548 = vmatpush1.bf16.msra.mxu0 0
          %549 = vmatprep.subr.bf16.mxu0 0
          %550 = vmatpush1.bf16.msra.mxu0 0
          %551 = vmatprep.mubr.bf16.mxu0 0
          %552 = vmatmul.mubr.bf16.gmra.mrb[0].mxu0 %v410
          %v553 = vpop.f32.mrb[0].mxu0
          %v554 = vadd.f32 %v432, %v553
          %v555 = vpop.f32.mrb[0].mxu0
          %v556 = vadd.f32 %v436, %v555
          %v557 = vpop.f32.mrb[0].mxu0
          %v558 = vpop.f32.mrb[0].mxu0
          %559 = vdwg.mxu0
          %v560 = vxor.u32 %v554, 2147483648
          %v561 = vxor.u32 %v556, 2147483648
          %v562 = vmul.f32 %v560, 1.442695
          %v563 = vpow.pop %v562
          %v564 = vmul.f32 %v561, 1.442695
          %v565 = vpow.pop %v564
          %v566 = vadd.f32 %v563, 1.0
          %v567 = vadd.f32 %v565, 1.0
          %v568 = vrcp.pop %v566
          %v569 = vmul.f32 1.0, %v568
          %v570 = vrcp.pop %v567
          %v571 = vmul.f32 1.0, %v570
          %v572 = vmul.f32 %v554, %v569
          %v573 = vmul.f32 %v556, %v571
          %574 = vst [vmem:[#allocation2] sm:$0xff] %v572
          %575 = vst [vmem:[#allocation2 + $0x8] sm:$0xff] %v573
        $region56: #{tpu_custom_call.1} parent=39 // pred_fallthru
          _
        %v576 = vld [vmem:[#allocation2] sm:$0xff]
        %v577 = vld [vmem:[#allocation2 + $0x8] sm:$0xff]
        %v578 = vpack.c.bf16 %v576, %v576
        %v579 = vpack.c.bf16 %v577, %v577
        %v580 = vld [vmem:[%s248] sm:$0xf]
        %v581 = vld [vmem:[%s248 + $0x4] sm:$0xf]
        %v582 = vld [vmem:[%s248 + $0x8] sm:$0xf]
        %v583 = vld [vmem:[%s248 + $0xc] sm:$0xf]
        %v584 = vld [vmem:[%s248 + $0x10] sm:$0xf]
        %v585 = vld [vmem:[%s248 + $0x14] sm:$0xf]
        %v586 = vld [vmem:[%s248 + $0x18] sm:$0xf]
        %v587 = vld [vmem:[%s248 + $0x1c] sm:$0xf]
        %v588 = vld [vmem:[%s248 + $0x20] sm:$0xf]
        %v589 = vld [vmem:[%s248 + $0x24] sm:$0xf]
        %v590 = vld [vmem:[%s248 + $0x28] sm:$0xf]
        %v591 = vld [vmem:[%s248 + $0x2c] sm:$0xf]
        %v592 = vld [vmem:[%s248 + $0x30] sm:$0xf]
        %v593 = vld [vmem:[%s248 + $0x34] sm:$0xf]
        %v594 = vld [vmem:[%s248 + $0x38] sm:$0xf]
        %v595 = vld [vmem:[%s248 + $0x3c] sm:$0xf]
        %v596 = vld [vmem:[%s248 + $0x40] sm:$0xf]
        %v597 = vld [vmem:[%s248 + $0x44] sm:$0xf]
        %v598 = vld [vmem:[%s248 + $0x48] sm:$0xf]
        %v599 = vld [vmem:[%s248 + $0x4c] sm:$0xf]
        %v600 = vld [vmem:[%s248 + $0x50] sm:$0xf]
        %v601 = vld [vmem:[%s248 + $0x54] sm:$0xf]
        %v602 = vld [vmem:[%s248 + $0x58] sm:$0xf]
        %v603 = vld [vmem:[%s248 + $0x5c] sm:$0xf]
        %v604 = vld [vmem:[%s248 + $0x60] sm:$0xf]
        %v605 = vld [vmem:[%s248 + $0x64] sm:$0xf]
        %v606 = vld [vmem:[%s248 + $0x68] sm:$0xf]
        %v607 = vld [vmem:[%s248 + $0x6c] sm:$0xf]
        %v608 = vld [vmem:[%s248 + $0x70] sm:$0xf]
        %v609 = vld [vmem:[%s248 + $0x74] sm:$0xf]
        %v610 = vld [vmem:[%s248 + $0x78] sm:$0xf]
        %v611 = vld [vmem:[%s248 + $0x7c] sm:$0xf]
        %v612 = vld [vmem:[%s280] sm:$0x1]
        %v614 = vlaneseq
        %v615 = vshrl.u32 %v614, 7
        %v616 = vsub.s32 0, %v615
        %v617 = vrot.slane %v612, %v616
        %v651 = vunpack.c.l.b16 %v580
        %v652 = vunpack.c.l.b16 %v581
        %v653 = vunpack.c.l.b16 %v582
        %v654 = vunpack.c.l.b16 %v583
        %v655 = vunpack.c.l.b16 %v584
        %v656 = vunpack.c.l.b16 %v585
        %v657 = vunpack.c.l.b16 %v586
        %v658 = vunpack.c.l.b16 %v587
        %v659 = vunpack.c.l.b16 %v588
        %v660 = vunpack.c.l.b16 %v589
        %v661 = vunpack.c.l.b16 %v590
        %v662 = vunpack.c.l.b16 %v591
        %v663 = vunpack.c.l.b16 %v592
        %v664 = vunpack.c.l.b16 %v593
        %v665 = vunpack.c.l.b16 %v594
        %v666 = vunpack.c.l.b16 %v595
        %v667 = vunpack.c.l.b16 %v596
        %v668 = vunpack.c.l.b16 %v597
        %v669 = vunpack.c.l.b16 %v598
        %v670 = vunpack.c.l.b16 %v599
        %v671 = vunpack.c.l.b16 %v600
        %v672 = vunpack.c.l.b16 %v601
        %v673 = vunpack.c.l.b16 %v602
        %v674 = vunpack.c.l.b16 %v603
        %v675 = vunpack.c.l.b16 %v604
        %v676 = vunpack.c.l.b16 %v605
        %v677 = vunpack.c.l.b16 %v606
        %v678 = vunpack.c.l.b16 %v607
        %v679 = vunpack.c.l.b16 %v608
        %v680 = vunpack.c.l.b16 %v609
        %v681 = vunpack.c.l.b16 %v610
        %v682 = vunpack.c.l.b16 %v611
        %v683 = vpack.c.b16 %v652, %v651
        %v684 = vpack.c.b16 %v654, %v653
        %v685 = vpack.c.b16 %v656, %v655
        %v686 = vpack.c.b16 %v658, %v657
        %v687 = vpack.c.b16 %v660, %v659
        %v688 = vpack.c.b16 %v662, %v661
        %v689 = vpack.c.b16 %v664, %v663
        %v690 = vpack.c.b16 %v666, %v665
        %v691 = vpack.c.b16 %v668, %v667
        %v692 = vpack.c.b16 %v670, %v669
        %v693 = vpack.c.b16 %v672, %v671
        %v694 = vpack.c.b16 %v674, %v673
        %v695 = vpack.c.b16 %v676, %v675
        %v696 = vpack.c.b16 %v678, %v677
        %v697 = vpack.c.b16 %v680, %v679
        %v698 = vpack.c.b16 %v682, %v681
        %715 = vmatprep.subr.bf16.mxu0 0
        %716 = vmatpush1.bf16.msra.mxu0 %v683
        %717 = vmatprep.subr.bf16.mxu0 0
        %718 = vmatpush1.bf16.msra.mxu0 %v684
        %719 = vmatprep.subr.bf16.mxu0 0
        %720 = vmatpush1.bf16.msra.mxu0 %v685
        %721 = vmatprep.subr.bf16.mxu0 0
        %722 = vmatpush1.bf16.msra.mxu0 %v686
        %723 = vmatprep.subr.bf16.mxu0 0
        %724 = vmatpush1.bf16.msra.mxu0 %v687
        %725 = vmatprep.subr.bf16.mxu0 0
        %726 = vmatpush1.bf16.msra.mxu0 %v688
        %727 = vmatprep.subr.bf16.mxu0 0
        %728 = vmatpush1.bf16.msra.mxu0 %v689
        %729 = vmatprep.subr.bf16.mxu0 0
        %730 = vmatpush1.bf16.msra.mxu0 %v690
        %731 = vmatprep.subr.bf16.mxu0 0
        %732 = vmatpush1.bf16.msra.mxu0 %v691
        %733 = vmatprep.subr.bf16.mxu0 0
        %734 = vmatpush1.bf16.msra.mxu0 %v692
        %735 = vmatprep.subr.bf16.mxu0 0
        %736 = vmatpush1.bf16.msra.mxu0 %v693
        %737 = vmatprep.subr.bf16.mxu0 0
        %738 = vmatpush1.bf16.msra.mxu0 %v694
        %739 = vmatprep.subr.bf16.mxu0 0
        %740 = vmatpush1.bf16.msra.mxu0 %v695
        %741 = vmatprep.subr.bf16.mxu0 0
        %742 = vmatpush1.bf16.msra.mxu0 %v696
        %743 = vmatprep.subr.bf16.mxu0 0
        %744 = vmatpush1.bf16.msra.mxu0 %v697
        %745 = vmatprep.subr.bf16.mxu0 0
        %746 = vmatpush1.bf16.msra.mxu0 %v698
        %747 = vmatprep.mubr.bf16.mxu0 %v579
        %748 = vmatmul.mubr.bf16.gmra.mrb[0].mxu0 %v578
        %v749 = vpop.f32.mrb[0].mxu0
        %v750 = vadd.f32 %v617, %v749
        %v751 = vpop.f32.mrb[0].mxu0
        %v752 = vpop.f32.mrb[0].mxu0
        %v753 = vpop.f32.mrb[0].mxu0
        %754 = vdwg.mxu0
        %755 = vst [vmem:[%s277] sm:$0xff] %v750
        %s756 = sand.u32 %s144, 1
        %s757 = scalar_lea.sflag [#allocation5], %s756
        %s758 = sand.u32 %s144, 1
        %s759 = smul.addr %s758, 8
        %s760 = scalar_lea.vmem [#allocation9], %s759
        // Predicated region
        $region57: #{tpu_custom_call.1} parent=39 // pred_check
          %p761 = pneg %p154
        $region58: #{tpu_custom_call.1} parent=39 // pred_check_branch
          %763 = sbr.rel (%p761) target = $region60
        $region59: #{tpu_custom_call.1} parent=39 // pred_region
          %s765 = ssub.s32 128, 128
          %766 = vsyncadd %s757, %s765
          %s767 = smul.addr %s21, 128
          %s768 = scalar_lea.hbm %s5, %s767
          %s770 = sshll.u32 %s760, 4
          %s771 = int_to_ptr.vmem [resolvable:$true] %s770
          %773 = dma.vmem_to_hbm [thread:$0]  %s771, 128, %s768, %s757
        $region60: #{tpu_custom_call.1} parent=39 // pred_fallthru
          _
      $region40: #{tpu_custom_call.1} parent=5 // pred_fallthru
        _
      %p774 = scmp.le.s32.totalorder 2, %s16
      // Predicated region
      $region61: #{tpu_custom_call.1} parent=5 // pred_check
        %p775 = pneg %p774
      $region62: #{tpu_custom_call.1} parent=5 // pred_check_branch
        %777 = sbr.rel (%p775) target = $region64
      $region63: #{tpu_custom_call.1} parent=5 // pred_region
        %s778 = ssub.s32 %s16, 2
        // Predicated region
        $region65: #{tpu_custom_call.1} parent=63 // pred_check
          %p779 = pneg %p160
        $region66: #{tpu_custom_call.1} parent=63 // pred_check_branch
          %781 = sbr.rel (%p779) target = $region68
        $region67: #{tpu_custom_call.1} parent=63 // pred_region
          %s782 = sand.u32 %s145, 1
          %s783 = scalar_lea.sflag [#allocation5], %s782
          %s784 = sand.u32 %s145, 1
          %s785 = smul.addr %s784, 8
          %s786 = scalar_lea.vmem [#allocation9], %s785
          %787 = dma.done %s783, 128
        $region68: #{tpu_custom_call.1} parent=63 // pred_fallthru
          _
      $region64: #{tpu_custom_call.1} parent=5 // pred_fallthru
        _
    $region6: #{tpu_custom_call.1} parent=1 // loop_footer
      %s20 = sadd.s32 1, %s16
    $region7: #{tpu_custom_call.1} parent=1 // loop_footer_branch
      %15 = sbr.rel target = $region3
    $region8: #{tpu_custom_call.1} parent=1 // loop_exit
      _
    %788 = vsyncpa [#allocation4], 1
    %s789 = scalar_lea.sflag [#allocation4], 1
    %790 = vsyncpa %s789, 1
    %791 = vsyncpa [#allocation7], 1
    %792 = vsyncpa [#allocation5], 1
    %s793 = scalar_lea.sflag [#allocation5], 1
    %794 = vsyncpa %s793, 1

</llo_original>
